<compile_context>
chip_gen: v7x
topology: tpu7x:2x2x1
jax: 0.10.0
libtpu: 0.0.40
codegen_flags: <defaults>
</compile_context>

<pallas_src>
import math

import numpy as np

import jax
import jax.numpy as jnp
from jax import lax
from jax.experimental import pallas as pl
from jax.experimental.pallas import tpu as pltpu

# ----------------------------- model dims -----------------------------------
B = 2            # batch
S = 8            # sequence length
H = 32           # hidden_size
NH = 4           # num_attention_heads
HD = H // NH     # head_dim
INNER = 4 * H    # MLP inner dim = 128
LN_EPS = 1e-5

BS = B * S       # flattened tokens              = 16
C = NH * BS      # expanded (head, batch, query) = 64

NVEC = 8         # packed bias/gain rows in the constant slab
SLAB_W = 128     # constant-slab lane width (one vreg row)


def _layer_norm(x, w, b):
    mu = jnp.mean(x, axis=-1, keepdims=True)
    xc = x - mu
    var = jnp.mean(xc * xc, axis=-1, keepdims=True)
    return xc * lax.rsqrt(var + LN_EPS) * w + b


def _gelu_new(x):
    # GPT-2 "gelu_new" (tanh approximation)
    c = math.sqrt(2.0 / math.pi)
    return 0.5 * x * (1.0 + jnp.tanh(c * (x + 0.044715 * x * x * x)))


def _block_kernel(x_ref, const_ref, wattn_ref, fcw_ref, w2_ref, o_ref):
    x = x_ref[...]                                        # (BS, H)

    # -------- unpack the constant slab (static sublane/lane slices) ---------
    ln1_w  = const_ref[0:1, 0:H]
    ln1_b  = const_ref[1:2, 0:H]
    attn_b = const_ref[2:3, 0:3 * H]                      # fused qkv bias (1, 3H)
    proj_b = const_ref[3:4, 0:H]
    ln2_w  = const_ref[4:5, 0:H]
    ln2_b  = const_ref[5:6, 0:H]
    fc_b   = const_ref[6:7, 0:INNER]
    w2_b   = const_ref[7:8, 0:H]
    head_mask = const_ref[NVEC:NVEC + C, 0:H]             # (C, H)  1.0 where dim in head
    attn_bias = const_ref[NVEC:NVEC + C, H:H + BS]        # (C, BS) 0.0 valid / -1e30

    c_attn_w = wattn_ref[:, 0:3 * H]                      # (H, 3H)
    proj_w   = wattn_ref[:, 3 * H:4 * H]                  # (H, H)

    scale = jnp.float32(1.0 / math.sqrt(HD))

    # ---------------- ln_1 + fused causal multi-head self-attention ---------
    h1 = _layer_norm(x, ln1_w, ln1_b)

    # Single fused qkv projection (one N=96 MXU push), then static lane slices.
    qkv = jnp.dot(h1, c_attn_w, preferred_element_type=jnp.float32) + attn_b   # (BS, 3H)
    q = qkv[:, 0:H] * scale
    k = qkv[:, H:2 * H]
    v = qkv[:, 2 * H:3 * H]

    # Replicate q once per head (sublane concat) and zero the non-head dims, so
    # a single (C,H)x(H,BS) matmul gives every (head,batch,query) x key score.
    q_bd = jnp.concatenate([q] * NH, axis=0) * head_mask                        # (C, H)

    s = lax.dot_general(q_bd, k, (((1,), (1,)), ((), ())),
                        preferred_element_type=jnp.float32)                     # (C, BS)
    s = s + attn_bias                                     # causal + same-batch mask

    # Row max/sum are now exact per-(head,batch,query) block statistics.
    m = jnp.max(s, axis=-1, keepdims=True)
    p = jnp.exp(s - m)                                    # masked entries underflow to 0
    denom = jnp.sum(p, axis=-1, keepdims=True)            # exact softmax denominator
    pn = p * pl.reciprocal(denom, approx=False)           # exact path: free here

    ctx_bd = jnp.dot(pn, v, preferred_element_type=jnp.float32) * head_mask     # (C, H)
    # Collapse the NH head blocks back to (BS, H): static sublane slices + VPU adds.
    ctx = ctx_bd[0:BS, :]
    for h in range(1, NH):
        ctx = ctx + ctx_bd[h * BS:(h + 1) * BS, :]

    attn_out = jnp.dot(ctx, proj_w, preferred_element_type=jnp.float32) + proj_b
    x = x + attn_out                                      # residual 1

    # ---------------- ln_2 + MLP ----------------
    h2 = _layer_norm(x, ln2_w, ln2_b)
    ff = jnp.dot(h2, fcw_ref[...], preferred_element_type=jnp.float32) + fc_b
    ff = _gelu_new(ff)
    ff = jnp.dot(ff, w2_ref[...], preferred_element_type=jnp.float32) + w2_b

    o_ref[...] = x + ff                                   # residual 2


# -------------------- wrapper-side (one-time) parameter packing --------------
def _build_mask_slab():
    # Row c = h*(B*S) + b*S + i  (head-major over flattened tokens).
    r = np.arange(C)
    col_h = np.arange(H)
    head_mask = ((r[:, None] // BS) == (col_h[None, :] // HD)).astype(np.float32)  # (C, H)
    col_k = np.arange(BS)
    same_batch = ((r[:, None] // S) % B) == (col_k[None, :] // S)
    causal = (col_k[None, :] % S) <= (r[:, None] % S)
    attn_bias = np.where(same_batch & causal, 0.0, -1e30).astype(np.float32)       # (C, BS)
    slab = np.zeros((C, SLAB_W), np.float32)
    slab[:, 0:H] = head_mask
    slab[:, H:H + BS] = attn_bias
    return slab


_MASK_SLAB = _build_mask_slab()   # static host constant, built once


def pack_params(params):
    """One-time packing of all small vectors + masks into a single slab, and the
    two attention weight matrices into one lane-aligned (H, 128) slab."""
    def row(v):
        v = np.asarray(v, dtype=np.float32).reshape(-1)
        out = np.zeros((1, SLAB_W), np.float32)
        out[0, :v.shape[0]] = v
        return out

    vec = np.concatenate([
        row(params["ln1_w"]), row(params["ln1_b"]),
        row(params["c_attn_b"]), row(params["attn_proj_b"]),
        row(params["ln2_w"]), row(params["ln2_b"]),
        row(params["c_fc_b"]), row(params["mlp_proj_b"]),
    ], axis=0)                                                     # (NVEC, 128)

    const_slab = jnp.asarray(np.concatenate([vec, _MASK_SLAB], axis=0))  # (NVEC+C, 128)
    attn_w = jnp.concatenate(
        [jnp.asarray(params["c_attn_w"], jnp.float32),
         jnp.asarray(params["attn_proj_w"], jnp.float32)], axis=1)       # (H, 4H) = (32, 128)

    return {
        "const_slab": const_slab,
        "attn_w": attn_w,
        "c_fc_w": jnp.asarray(params["c_fc_w"], jnp.float32),
        "mlp_proj_w": jnp.asarray(params["mlp_proj_w"], jnp.float32),
    }


def transformer_block(x, packed):
    """x: (B, S, H) float32.  packed: output of pack_params()."""
    Bx, Sx, Hx = x.shape
    assert (Bx, Sx, Hx) == (B, S, H)

    x2d = x.reshape(BS, H)   # free wrapper-side reshape (contiguous)

    def fs(shape):
        return pl.BlockSpec(shape, lambda i, _s=shape: (0,) * len(_s))

    out = pl.pallas_call(
        _block_kernel,
        out_shape=jax.ShapeDtypeStruct((BS, H), jnp.float32),
        grid=(1,),                                   # whole problem resident in VMEM
        in_specs=[
            fs((BS, H)),                             # x (flattened tokens)
            fs((NVEC + C, SLAB_W)),                  # packed vectors + masks
            fs((H, 4 * H)),                          # [c_attn_w | attn_proj_w]
            fs((H, INNER)),                          # mlp c_fc w
            fs((INNER, H)),                          # mlp c_proj w
        ],
        out_specs=fs((BS, H)),
        compiler_params=pltpu.CompilerParams(
            dimension_semantics=("arbitrary",)),
    )(x2d, packed["const_slab"], packed["attn_w"],
      packed["c_fc_w"], packed["mlp_proj_w"])

    return out.reshape(B, S, H)


# ---------------------- pure-JAX reference (for sanity) ----------------------
def reference_block(x, p):
    def ln(t, w, b):
        mu = jnp.mean(t, axis=-1, keepdims=True)
        var = jnp.mean((t - mu) ** 2, axis=-1, keepdims=True)
        return (t - mu) / jnp.sqrt(var + LN_EPS) * w + b

    h1 = ln(x, p["ln1_w"], p["ln1_b"])
    qkv = h1 @ p["c_attn_w"] + p["c_attn_b"]
    q, k, v = jnp.split(qkv, 3, axis=-1)
    q = q.reshape(B, S, NH, HD).transpose(0, 2, 1, 3)
    k = k.reshape(B, S, NH, HD).transpose(0, 2, 1, 3)
    v = v.reshape(B, S, NH, HD).transpose(0, 2, 1, 3)
    scores = jnp.einsum("bhqd,bhkd->bhqk", q, k) / math.sqrt(HD)
    causal = jnp.tril(jnp.ones((S, S), dtype=bool))
    scores = jnp.where(causal, scores, jnp.finfo(jnp.float32).min)
    p_att = jax.nn.softmax(scores, axis=-1)
    ctx = jnp.einsum("bhqk,bhkd->bhqd", p_att, v).transpose(0, 2, 1, 3).reshape(B, S, H)
    attn_out = ctx @ p["attn_proj_w"] + p["attn_proj_b"]
    x = x + attn_out
    h2 = ln(x, p["ln2_w"], p["ln2_b"])
    c = math.sqrt(2.0 / math.pi)
    ff = h2 @ p["c_fc_w"] + p["c_fc_b"]
    ff = 0.5 * ff * (1.0 + jnp.tanh(c * (ff + 0.044715 * ff ** 3)))
    ff = ff @ p["mlp_proj_w"] + p["mlp_proj_b"]
    return x + ff


# ------------------------------- main ----------------------------------------
if __name__ == "__main__":
    key = jax.random.PRNGKey(0)
    ks = jax.random.split(key, 12)

    params = {
        "ln1_w": (1.0 + 0.1 * jax.random.normal(ks[0], (1, H))).astype(jnp.float32),
        "ln1_b": (0.1 * jax.random.normal(ks[1], (1, H))).astype(jnp.float32),
        "c_attn_w": (0.02 * jax.random.normal(ks[2], (H, 3 * H))).astype(jnp.float32),
        "c_attn_b": (0.02 * jax.random.normal(ks[3], (1, 3 * H))).astype(jnp.float32),
        "attn_proj_w": (0.02 * jax.random.normal(ks[4], (H, H))).astype(jnp.float32),
        "attn_proj_b": (0.02 * jax.random.normal(ks[5], (1, H))).astype(jnp.float32),
        "ln2_w": (1.0 + 0.1 * jax.random.normal(ks[6], (1, H))).astype(jnp.float32),
        "ln2_b": (0.1 * jax.random.normal(ks[7], (1, H))).astype(jnp.float32),
        "c_fc_w": (0.02 * jax.random.normal(ks[8], (H, INNER))).astype(jnp.float32),
        "c_fc_b": (0.02 * jax.random.normal(ks[9], (1, INNER))).astype(jnp.float32),
        "mlp_proj_w": (0.02 * jax.random.normal(ks[10], (INNER, H))).astype(jnp.float32),
        "mlp_proj_b": (0.02 * jax.random.normal(ks[5], (1, H))).astype(jnp.float32),
    }

    x = jax.random.normal(ks[11], (B, S, H), dtype=jnp.float32)

    packed = pack_params(params)     # one-time packing (not on the per-call path)

    out = transformer_block(x, packed)
    out = jax.block_until_ready(out)

    ref = reference_block(x, params)
    assert out.shape == (B, S, H)
    # Exact softmax reciprocal + f32 throughout -> tight tolerance.
    assert jnp.allclose(out, ref, atol=1e-4, rtol=1e-4), "mismatch vs reference"

    print("KERNEL_OK")
</pallas_src>

<mosaic_0001>
module attributes {stable_mosaic.version = 11 : i64} {
  func.func @_block_kernel(%arg0: i32, %arg1: memref<16x32xf32, #tpu.memory_space<vmem>>, %arg2: memref<72x128xf32, #tpu.memory_space<vmem>>, %arg3: memref<32x128xf32, #tpu.memory_space<vmem>>, %arg4: memref<32x128xf32, #tpu.memory_space<vmem>>, %arg5: memref<128x32xf32, #tpu.memory_space<vmem>>, %arg6: memref<16x32xf32, #tpu.memory_space<vmem>>) attributes {dimension_semantics = [#tpu.dimension_semantics<arbitrary>], iteration_bounds = array<i64: 1>, scalar_prefetch = 0 : i64, scratch_operands = 0 : i64, tpu.core_type = #tpu.core_type<tc>, window_params = [{pipeline_mode = #tpu.pipeline_mode<synchronous>, transform_indices = @transform_0, window_bounds = array<i64: 16, 32>}, {pipeline_mode = #tpu.pipeline_mode<synchronous>, transform_indices = @transform_1, window_bounds = array<i64: 72, 128>}, {pipeline_mode = #tpu.pipeline_mode<synchronous>, transform_indices = @transform_2, window_bounds = array<i64: 32, 128>}, {pipeline_mode = #tpu.pipeline_mode<synchronous>, transform_indices = @transform_3, window_bounds = array<i64: 32, 128>}, {pipeline_mode = #tpu.pipeline_mode<synchronous>, transform_indices = @transform_4, window_bounds = array<i64: 128, 32>}, {pipeline_mode = #tpu.pipeline_mode<synchronous>, transform_indices = @transform_5, window_bounds = array<i64: 16, 32>}]} {
    %c0 = arith.constant 0 : index
    %c0_0 = arith.constant 0 : index
    %0 = vector.load %arg1[%c0, %c0_0] : memref<16x32xf32, #tpu.memory_space<vmem>>, vector<16x32xf32>
    %c0_1 = arith.constant 0 : index
    %c0_2 = arith.constant 0 : index
    %1 = vector.load %arg2[%c0_1, %c0_2] : memref<72x128xf32, #tpu.memory_space<vmem>>, vector<1x32xf32>
    %c1 = arith.constant 1 : index
    %c0_3 = arith.constant 0 : index
    %2 = vector.load %arg2[%c1, %c0_3] : memref<72x128xf32, #tpu.memory_space<vmem>>, vector<1x32xf32>
    %c2 = arith.constant 2 : index
    %c0_4 = arith.constant 0 : index
    %3 = vector.load %arg2[%c2, %c0_4] : memref<72x128xf32, #tpu.memory_space<vmem>>, vector<1x96xf32>
    %c3 = arith.constant 3 : index
    %c0_5 = arith.constant 0 : index
    %4 = vector.load %arg2[%c3, %c0_5] : memref<72x128xf32, #tpu.memory_space<vmem>>, vector<1x32xf32>
    %c4 = arith.constant 4 : index
    %c0_6 = arith.constant 0 : index
    %5 = vector.load %arg2[%c4, %c0_6] : memref<72x128xf32, #tpu.memory_space<vmem>>, vector<1x32xf32>
    %c5 = arith.constant 5 : index
    %c0_7 = arith.constant 0 : index
    %6 = vector.load %arg2[%c5, %c0_7] : memref<72x128xf32, #tpu.memory_space<vmem>>, vector<1x32xf32>
    %c6 = arith.constant 6 : index
    %c0_8 = arith.constant 0 : index
    %7 = vector.load %arg2[%c6, %c0_8] : memref<72x128xf32, #tpu.memory_space<vmem>>, vector<1x128xf32>
    %c7 = arith.constant 7 : index
    %c0_9 = arith.constant 0 : index
    %8 = vector.load %arg2[%c7, %c0_9] : memref<72x128xf32, #tpu.memory_space<vmem>>, vector<1x32xf32>
    %c8 = arith.constant 8 : index
    %c0_10 = arith.constant 0 : index
    %9 = vector.load %arg2[%c8, %c0_10] : memref<72x128xf32, #tpu.memory_space<vmem>>, vector<64x32xf32>
    %c8_11 = arith.constant 8 : index
    %c32 = arith.constant 32 : index
    %10 = vector.load %arg2[%c8_11, %c32] : memref<72x128xf32, #tpu.memory_space<vmem>>, vector<64x16xf32>
    %c0_12 = arith.constant 0 : index
    %c0_13 = arith.constant 0 : index
    %11 = vector.load %arg3[%c0_12, %c0_13] : memref<32x128xf32, #tpu.memory_space<vmem>>, vector<32x96xf32>
    %c0_14 = arith.constant 0 : index
    %c96 = arith.constant 96 : index
    %12 = vector.load %arg3[%c0_14, %c96] : memref<32x128xf32, #tpu.memory_space<vmem>>, vector<32x32xf32>
    %cst = arith.constant dense<0.000000e+00> : vector<16xf32>
    %13 = vector.multi_reduction <add>, %0, %cst [1] : vector<16x32xf32> to vector<16xf32>
    %14 = vector.shape_cast %13 : vector<16xf32> to vector<16x1xf32>
    %cst_15 = arith.constant 3.200000e+01 : f32
    %15 = vector.broadcast %cst_15 : f32 to vector<16x1xf32>
    %16 = arith.divf %14, %15 : vector<16x1xf32>
    %17 = vector.broadcast %16 : vector<16x1xf32> to vector<16x32xf32>
    %18 = arith.subf %0, %17 : vector<16x32xf32>
    %19 = arith.mulf %18, %18 : vector<16x32xf32>
    %cst_16 = arith.constant dense<0.000000e+00> : vector<16xf32>
    %20 = vector.multi_reduction <add>, %19, %cst_16 [1] : vector<16x32xf32> to vector<16xf32>
    %21 = vector.shape_cast %20 : vector<16xf32> to vector<16x1xf32>
    %cst_17 = arith.constant 3.200000e+01 : f32
    %22 = vector.broadcast %cst_17 : f32 to vector<16x1xf32>
    %23 = arith.divf %21, %22 : vector<16x1xf32>
    %cst_18 = arith.constant 9.99999974E-6 : f32
    %24 = vector.broadcast %cst_18 : f32 to vector<16x1xf32>
    %25 = arith.addf %23, %24 : vector<16x1xf32>
    %26 = math.rsqrt %25 : vector<16x1xf32>
    %27 = vector.broadcast %26 : vector<16x1xf32> to vector<16x32xf32>
    %28 = arith.mulf %18, %27 : vector<16x32xf32>
    %29 = vector.broadcast %1 : vector<1x32xf32> to vector<16x32xf32>
    %30 = arith.mulf %28, %29 : vector<16x32xf32>
    %31 = vector.broadcast %2 : vector<1x32xf32> to vector<16x32xf32>
    %32 = arith.addf %30, %31 : vector<16x32xf32>
    %cst_19 = arith.constant dense<0.000000e+00> : vector<16x96xf32>
    %33 = tpu.matmul %32, %11, %cst_19 {dimension_numbers = #tpu.dot_dimension_numbers<[1], [0], [0], [1], [0, 0, 1, 1], [], []>} : vector<16x32xf32>, vector<32x96xf32>, vector<16x96xf32> -> vector<16x96xf32>
    %34 = vector.broadcast %3 : vector<1x96xf32> to vector<16x96xf32>
    %35 = arith.addf %33, %34 : vector<16x96xf32>
    %36 = vector.extract_strided_slice %35 {offsets = [0, 0], sizes = [16, 32], strides = [1, 1]} : vector<16x96xf32> to vector<16x32xf32>
    %cst_20 = arith.constant 0.353553385 : f32
    %37 = vector.broadcast %cst_20 : f32 to vector<16x32xf32>
    %38 = arith.mulf %36, %37 : vector<16x32xf32>
    %39 = vector.extract_strided_slice %35 {offsets = [0, 32], sizes = [16, 32], strides = [1, 1]} : vector<16x96xf32> to vector<16x32xf32>
    %40 = vector.extract_strided_slice %35 {offsets = [0, 64], sizes = [16, 32], strides = [1, 1]} : vector<16x96xf32> to vector<16x32xf32>
    %41 = tpu.concatenate %38, %38, %38, %38 in 0 : vector<16x32xf32>, vector<16x32xf32>, vector<16x32xf32>, vector<16x32xf32> -> vector<64x32xf32>
    %42 = arith.mulf %41, %9 : vector<64x32xf32>
    %cst_21 = arith.constant dense<0.000000e+00> : vector<64x16xf32>
    %43 = tpu.matmul %42, %39, %cst_21 {dimension_numbers = #tpu.dot_dimension_numbers<[1], [1], [0], [0], [0, 0, 1, 0], [], []>} : vector<64x32xf32>, vector<16x32xf32>, vector<64x16xf32> -> vector<64x16xf32>
    %44 = arith.addf %43, %10 : vector<64x16xf32>
    %cst_22 = arith.constant dense<0xFF800000> : vector<64xf32>
    %45 = vector.multi_reduction <maximumf>, %44, %cst_22 [1] : vector<64x16xf32> to vector<64xf32>
    %46 = vector.shape_cast %45 : vector<64xf32> to vector<64x1xf32>
    %47 = vector.broadcast %46 : vector<64x1xf32> to vector<64x16xf32>
    %48 = arith.subf %44, %47 : vector<64x16xf32>
    %49 = math.exp %48 : vector<64x16xf32>
    %cst_23 = arith.constant dense<0.000000e+00> : vector<64xf32>
    %50 = vector.multi_reduction <add>, %49, %cst_23 [1] : vector<64x16xf32> to vector<64xf32>
    %51 = vector.shape_cast %50 : vector<64xf32> to vector<64x1xf32>
    %52 = tpu.reciprocal %51 : vector<64x1xf32> -> vector<64x1xf32>
    %53 = vector.broadcast %52 : vector<64x1xf32> to vector<64x16xf32>
    %54 = arith.mulf %49, %53 : vector<64x16xf32>
    %cst_24 = arith.constant dense<0.000000e+00> : vector<64x32xf32>
    %55 = tpu.matmul %54, %40, %cst_24 {dimension_numbers = #tpu.dot_dimension_numbers<[1], [0], [0], [1], [0, 0, 1, 1], [], []>} : vector<64x16xf32>, vector<16x32xf32>, vector<64x32xf32> -> vector<64x32xf32>
    %56 = arith.mulf %55, %9 : vector<64x32xf32>
    %57 = vector.extract_strided_slice %56 {offsets = [0, 0], sizes = [16, 32], strides = [1, 1]} : vector<64x32xf32> to vector<16x32xf32>
    %58 = vector.extract_strided_slice %56 {offsets = [16, 0], sizes = [16, 32], strides = [1, 1]} : vector<64x32xf32> to vector<16x32xf32>
    %59 = arith.addf %57, %58 : vector<16x32xf32>
    %60 = vector.extract_strided_slice %56 {offsets = [32, 0], sizes = [16, 32], strides = [1, 1]} : vector<64x32xf32> to vector<16x32xf32>
    %61 = arith.addf %59, %60 : vector<16x32xf32>
    %62 = vector.extract_strided_slice %56 {offsets = [48, 0], sizes = [16, 32], strides = [1, 1]} : vector<64x32xf32> to vector<16x32xf32>
    %63 = arith.addf %61, %62 : vector<16x32xf32>
    %cst_25 = arith.constant dense<0.000000e+00> : vector<16x32xf32>
    %64 = tpu.matmul %63, %12, %cst_25 {dimension_numbers = #tpu.dot_dimension_numbers<[1], [0], [0], [1], [0, 0, 1, 1], [], []>} : vector<16x32xf32>, vector<32x32xf32>, vector<16x32xf32> -> vector<16x32xf32>
    %65 = vector.broadcast %4 : vector<1x32xf32> to vector<16x32xf32>
    %66 = arith.addf %64, %65 : vector<16x32xf32>
    %67 = arith.addf %0, %66 : vector<16x32xf32>
    %cst_26 = arith.constant dense<0.000000e+00> : vector<16xf32>
    %68 = vector.multi_reduction <add>, %67, %cst_26 [1] : vector<16x32xf32> to vector<16xf32>
    %69 = vector.shape_cast %68 : vector<16xf32> to vector<16x1xf32>
    %cst_27 = arith.constant 3.200000e+01 : f32
    %70 = vector.broadcast %cst_27 : f32 to vector<16x1xf32>
    %71 = arith.divf %69, %70 : vector<16x1xf32>
    %72 = vector.broadcast %71 : vector<16x1xf32> to vector<16x32xf32>
    %73 = arith.subf %67, %72 : vector<16x32xf32>
    %74 = arith.mulf %73, %73 : vector<16x32xf32>
    %cst_28 = arith.constant dense<0.000000e+00> : vector<16xf32>
    %75 = vector.multi_reduction <add>, %74, %cst_28 [1] : vector<16x32xf32> to vector<16xf32>
    %76 = vector.shape_cast %75 : vector<16xf32> to vector<16x1xf32>
    %cst_29 = arith.constant 3.200000e+01 : f32
    %77 = vector.broadcast %cst_29 : f32 to vector<16x1xf32>
    %78 = arith.divf %76, %77 : vector<16x1xf32>
    %cst_30 = arith.constant 9.99999974E-6 : f32
    %79 = vector.broadcast %cst_30 : f32 to vector<16x1xf32>
    %80 = arith.addf %78, %79 : vector<16x1xf32>
    %81 = math.rsqrt %80 : vector<16x1xf32>
    %82 = vector.broadcast %81 : vector<16x1xf32> to vector<16x32xf32>
    %83 = arith.mulf %73, %82 : vector<16x32xf32>
    %84 = vector.broadcast %5 : vector<1x32xf32> to vector<16x32xf32>
    %85 = arith.mulf %83, %84 : vector<16x32xf32>
    %86 = vector.broadcast %6 : vector<1x32xf32> to vector<16x32xf32>
    %87 = arith.addf %85, %86 : vector<16x32xf32>
    %c0_31 = arith.constant 0 : index
    %c0_32 = arith.constant 0 : index
    %88 = vector.load %arg4[%c0_31, %c0_32] : memref<32x128xf32, #tpu.memory_space<vmem>>, vector<32x128xf32>
    %cst_33 = arith.constant dense<0.000000e+00> : vector<16x128xf32>
    %89 = tpu.matmul %87, %88, %cst_33 {dimension_numbers = #tpu.dot_dimension_numbers<[1], [0], [0], [1], [0, 0, 1, 1], [], []>} : vector<16x32xf32>, vector<32x128xf32>, vector<16x128xf32> -> vector<16x128xf32>
    %90 = vector.broadcast %7 : vector<1x128xf32> to vector<16x128xf32>
    %91 = arith.addf %89, %90 : vector<16x128xf32>
    %cst_34 = arith.constant 5.000000e-01 : f32
    %92 = vector.broadcast %cst_34 : f32 to vector<16x128xf32>
    %93 = arith.mulf %92, %91 : vector<16x128xf32>
    %cst_35 = arith.constant 4.471500e-02 : f32
    %94 = vector.broadcast %cst_35 : f32 to vector<16x128xf32>
    %95 = arith.mulf %94, %91 : vector<16x128xf32>
    %96 = arith.mulf %95, %91 : vector<16x128xf32>
    %97 = arith.mulf %96, %91 : vector<16x128xf32>
    %98 = arith.addf %91, %97 : vector<16x128xf32>
    %cst_36 = arith.constant 0.797884583 : f32
    %99 = vector.broadcast %cst_36 : f32 to vector<16x128xf32>
    %100 = arith.mulf %99, %98 : vector<16x128xf32>
    %101 = math.tanh %100 : vector<16x128xf32>
    %cst_37 = arith.constant 1.000000e+00 : f32
    %102 = vector.broadcast %cst_37 : f32 to vector<16x128xf32>
    %103 = arith.addf %102, %101 : vector<16x128xf32>
    %104 = arith.mulf %93, %103 : vector<16x128xf32>
    %c0_38 = arith.constant 0 : index
    %c0_39 = arith.constant 0 : index
    %105 = vector.load %arg5[%c0_38, %c0_39] : memref<128x32xf32, #tpu.memory_space<vmem>>, vector<128x32xf32>
    %cst_40 = arith.constant dense<0.000000e+00> : vector<16x32xf32>
    %106 = tpu.matmul %104, %105, %cst_40 {dimension_numbers = #tpu.dot_dimension_numbers<[1], [0], [0], [1], [0, 0, 1, 1], [], []>} : vector<16x128xf32>, vector<128x32xf32>, vector<16x32xf32> -> vector<16x32xf32>
    %107 = vector.broadcast %8 : vector<1x32xf32> to vector<16x32xf32>
    %108 = arith.addf %106, %107 : vector<16x32xf32>
    %109 = arith.addf %67, %108 : vector<16x32xf32>
    %c0_41 = arith.constant 0 : index
    %c0_42 = arith.constant 0 : index
    %110 = vector.load %arg6[%c0_41, %c0_42] : memref<16x32xf32, #tpu.memory_space<vmem>>, vector<16x32xf32>
    tpu.vector_store %arg6[%c0_41, %c0_42], %109 {strides = array<i32>} : memref<16x32xf32, #tpu.memory_space<vmem>>, vector<16x32xf32>,
    return
  }
  func.func @transform_0(%arg0: i32) -> (i32, i32) {
    %c0_i32 = arith.constant 0 : i32
    %c0_i32_0 = arith.constant 0 : i32
    %c0_i32_1 = arith.constant 0 : i32
    return %c0_i32, %c0_i32_0 : i32, i32
  }
  func.func @transform_1(%arg0: i32) -> (i32, i32) {
    %c0_i32 = arith.constant 0 : i32
    %c0_i32_0 = arith.constant 0 : i32
    %c0_i32_1 = arith.constant 0 : i32
    return %c0_i32, %c0_i32_0 : i32, i32
  }
  func.func @transform_2(%arg0: i32) -> (i32, i32) {
    %c0_i32 = arith.constant 0 : i32
    %c0_i32_0 = arith.constant 0 : i32
    %c0_i32_1 = arith.constant 0 : i32
    return %c0_i32, %c0_i32_0 : i32, i32
  }
  func.func @transform_3(%arg0: i32) -> (i32, i32) {
    %c0_i32 = arith.constant 0 : i32
    %c0_i32_0 = arith.constant 0 : i32
    %c0_i32_1 = arith.constant 0 : i32
    return %c0_i32, %c0_i32_0 : i32, i32
  }
  func.func @transform_4(%arg0: i32) -> (i32, i32) {
    %c0_i32 = arith.constant 0 : i32
    %c0_i32_0 = arith.constant 0 : i32
    %c0_i32_1 = arith.constant 0 : i32
    return %c0_i32, %c0_i32_0 : i32, i32
  }
  func.func @transform_5(%arg0: i32) -> (i32, i32) {
    %c0_i32 = arith.constant 0 : i32
    %c0_i32_0 = arith.constant 0 : i32
    %c0_i32_1 = arith.constant 0 : i32
    return %c0_i32, %c0_i32_0 : i32, i32
  }
}

</mosaic_0001>

<llo_original>
// kernel: tpu_custom_call.1
$region0: #{tpu_custom_call.1}
  #allocation0 [shape = 'u32[]', space=smem, size = 0x4, offset = 0x4, fixed_abs, tag = 'smem constant byte address 0x4 - core index']
  #allocation1 [shape = 'u32[144,128]{1,0:T(1,128)}', space=vmem, size = 0x12000, scoped, tag = 'internal scratch']
  %s0 = inlined_call_operand.vmem [shape: f32[16,32], index: 0, kind: input, shape index: {}]
  %s1 = inlined_call_operand.vmem [shape: f32[72,128], index: 1, kind: input, shape index: {}]
  %s2 = inlined_call_operand.vmem [shape: f32[32,128], index: 2, kind: input, shape index: {}]
  %s3 = inlined_call_operand.vmem [shape: f32[32,128], index: 3, kind: input, shape index: {}]
  %s4 = inlined_call_operand.vmem [shape: f32[128,32], index: 4, kind: input, shape index: {}]
  %s5 = inlined_call_operand.hbm [shape: f32[16,32], index: 5, kind: output, shape index: {}]
  %s6 = sld [smem:[#allocation0]]
  $region30: #{tpu_custom_call.1} parent=0
    _
  %s8 = ssub.s32 1, %s6
  %s9 = scalar_select 0, %s8, %s6
  $region1: #{tpu_custom_call.1} parent=0
    #allocation2 [shape = 'u8[8192]{0}', space=vmem, size = 0x2000, scoped, tag = 'output window, operand 0, single buffered']
    #allocation3 [shape = 's32[1]{0}', space=sflag, size = 0x4, scoped, tag = 'scoped memory for tpu_custom_call.1']
    %10 = vsyncpa [#allocation3], 0
    // Predicated region
    $region2: #{tpu_custom_call.1} parent=1 // pred_check
      _
    $region3: #{tpu_custom_call.1} parent=1 // pred_check_branch
      %12 = sbr.rel (0) target = $region5
    $region4: #{tpu_custom_call.1} parent=1 // pred_region
      _
    $region5: #{tpu_custom_call.1} parent=1 // pred_fallthru
      _
    // Predicated region
    $region6: #{tpu_custom_call.1} parent=1 // pred_check
      _
    $region7: #{tpu_custom_call.1} parent=1 // pred_check_branch
      %14 = sbr.rel (0) target = $region9
    $region8: #{tpu_custom_call.1} parent=1 // pred_region
      _
    $region9: #{tpu_custom_call.1} parent=1 // pred_fallthru
      _
    // Predicated region
    $region10: #{tpu_custom_call.1} parent=1 // pred_check
      _
    $region11: #{tpu_custom_call.1} parent=1 // pred_check_branch
      %16 = sbr.rel (0) target = $region13
    $region12: #{tpu_custom_call.1} parent=1 // pred_region
      _
    $region13: #{tpu_custom_call.1} parent=1 // pred_fallthru
      _
    // Predicated region
    $region14: #{tpu_custom_call.1} parent=1 // pred_check
      _
    $region15: #{tpu_custom_call.1} parent=1 // pred_check_branch
      %18 = sbr.rel (0) target = $region17
    $region16: #{tpu_custom_call.1} parent=1 // pred_region
      _
    $region17: #{tpu_custom_call.1} parent=1 // pred_fallthru
      _
    // Predicated region
    $region18: #{tpu_custom_call.1} parent=1 // pred_check
      _
    $region19: #{tpu_custom_call.1} parent=1 // pred_check_branch
      %20 = sbr.rel (0) target = $region21
    $region20: #{tpu_custom_call.1} parent=1 // pred_region
      _
    $region21: #{tpu_custom_call.1} parent=1 // pred_fallthru
      _
    %v21 = vld [vmem:[%s0] sm:$0xff]
    %v22 = vld [vmem:[%s0 + $0x8] sm:$0xff]
    %v23 = vld [vmem:[%s1] sm:$0x1]
    %v24 = vld [vmem:[%s1 + $0x1] sm:$0x1]
    %v25 = vld [vmem:[%s1 + $0x2] sm:$0x1]
    %v26 = vld [vmem:[%s1 + $0x3] sm:$0x1]
    %v27 = vld [vmem:[%s1 + $0x4] sm:$0x1]
    %v28 = vld [vmem:[%s1 + $0x5] sm:$0x1]
    %v29 = vld [vmem:[%s1 + $0x6] sm:$0x1]
    %v30 = vld [vmem:[%s1 + $0x7] sm:$0x1]
    %v31 = vld [vmem:[%s1 + $0x8] sm:$0xff]
    %v32 = vld [vmem:[%s1 + $0x10] sm:$0xff]
    %v33 = vld [vmem:[%s1 + $0x18] sm:$0xff]
    %v34 = vld [vmem:[%s1 + $0x20] sm:$0xff]
    %v35 = vld [vmem:[%s1 + $0x28] sm:$0xff]
    %v36 = vld [vmem:[%s1 + $0x30] sm:$0xff]
    %v37 = vld [vmem:[%s1 + $0x38] sm:$0xff]
    %v38 = vld [vmem:[%s1 + $0x40] sm:$0xff]
    %v39 = vld [vmem:[%s2] sm:$0xff]
    %v40 = vld [vmem:[%s2 + $0x8] sm:$0xff]
    %v41 = vld [vmem:[%s2 + $0x10] sm:$0xff]
    %v42 = vld [vmem:[%s2 + $0x18] sm:$0xff]
    %vm43 = vcmask 261120
    %v44 = vsel %vm43, %v21, 0.0
    %45 = vadd.xlane.f32.xlu0 %v44
    %v46 = vpop.xlane.xlu0 %45
    %v47 = vsel %vm43, %v22, 0.0
    %48 = vadd.xlane.f32.xlu0 %v47
    %v49 = vpop.xlane.xlu0 %48
    %v50 = vrcp.pop 32.0
    %v51 = vmul.f32 %v46, %v50
    %v52 = vmul.f32 %v49, %v50
    %v53 = vsub.f32 %v21, %v51
    %v54 = vsub.f32 %v22, %v52
    %v55 = vmul.f32 %v53, %v53
    %v56 = vmul.f32 %v54, %v54
    %v57 = vsel %vm43, %v55, 0.0
    %58 = vadd.xlane.f32.xlu0 %v57
    %v59 = vpop.xlane.xlu0 %58
    %v60 = vsel %vm43, %v56, 0.0
    %61 = vadd.xlane.f32.xlu0 %v60
    %v62 = vpop.xlane.xlu0 %61
    %v63 = vmul.f32 %v59, %v50
    %v64 = vmul.f32 %v62, %v50
    %v65 = vadd.f32 %v63, 1e-05
    %v66 = vadd.f32 %v64, 1e-05
    %v67 = vrsqrt.pop %v65
    %v68 = vrsqrt.pop %v66
    %v69 = vmul.f32 %v53, %v67
    %v70 = vmul.f32 %v54, %v68
    %v71 = vlaneseq
    %v72 = vshrl.u32 %v71, 7
    %v73 = vsub.s32 0, %v72
    %v74 = vrot.slane %v23, %v73
    %v75 = vmul.f32 %v69, %v74
    %v76 = vmul.f32 %v70, %v74
    %v77 = vlaneseq
    %v78 = vshrl.u32 %v77, 7
    %v79 = vsub.s32 0, %v78
    %v80 = vrot.slane %v24, %v79
    %v81 = vadd.f32 %v75, %v80
    %v82 = vadd.f32 %v76, %v80
    %v83 = vlaneseq
    %v84 = vshrl.u32 %v83, 7
    %v85 = vsub.s32 0, %v84
    %v86 = vrot.slane %v25, %v85
    %v88 = vsel %vm43, %v81, 0
    %v91 = vsel %vm43, %v82, 0
    %93 = vmatprep.subr.mxu0 0.0
    %94 = vmatpush1.msra.mxu0 %v39
    %95 = vmatprep.subr.mxu0 0.0
    %96 = vmatpush1.msra.mxu0 %v40
    %97 = vmatprep.subr.mxu0 0.0
    %98 = vmatpush1.msra.mxu0 %v41
    %99 = vmatprep.subr.mxu0 0.0
    %100 = vmatpush1.msra.mxu0 %v42
    %101 = vmatprep.subr.mxu0 0.0
    %102 = vmatpush1.msra.mxu0 0.0
    %103 = vmatprep.subr.mxu0 0.0
    %104 = vmatpush1.msra.mxu0 0.0
    %105 = vmatprep.subr.mxu0 0.0
    %106 = vmatpush1.msra.mxu0 0.0
    %107 = vmatprep.subr.mxu0 0.0
    %108 = vmatpush1.msra.mxu0 0.0
    %109 = vmatprep.subr.mxu0 0.0
    %110 = vmatpush1.msra.mxu0 0.0
    %111 = vmatprep.subr.mxu0 0.0
    %112 = vmatpush1.msra.mxu0 0.0
    %113 = vmatprep.subr.mxu0 0.0
    %114 = vmatpush1.msra.mxu0 0.0
    %115 = vmatprep.subr.mxu0 0.0
    %116 = vmatpush1.msra.mxu0 0.0
    %117 = vmatprep.subr.mxu0 0.0
    %118 = vmatpush1.msra.mxu0 0.0
    %119 = vmatprep.subr.mxu0 0.0
    %120 = vmatpush1.msra.mxu0 0.0
    %121 = vmatprep.subr.mxu0 0.0
    %122 = vmatpush1.msra.mxu0 0.0
    %123 = vmatprep.subr.mxu0 0.0
    %124 = vmatpush1.msra.mxu0 0.0
    %125 = vmatprep.subr.mxu0 0.0
    %126 = vmatpush1.msra.mxu0 0.0
    %127 = vmatprep.subr.mxu0 0.0
    %128 = vmatpush1.msra.mxu0 0.0
    %129 = vmatprep.subr.mxu0 0.0
    %130 = vmatpush1.msra.mxu0 0.0
    %131 = vmatprep.subr.mxu0 0.0
    %132 = vmatpush1.msra.mxu0 0.0
    %133 = vmatprep.subr.mxu0 0.0
    %134 = vmatpush1.msra.mxu0 0.0
    %135 = vmatprep.subr.mxu0 0.0
    %136 = vmatpush1.msra.mxu0 0.0
    %137 = vmatprep.subr.mxu0 0.0
    %138 = vmatpush1.msra.mxu0 0.0
    %139 = vmatprep.subr.mxu0 0.0
    %140 = vmatpush1.msra.mxu0 0.0
    %141 = vmatprep.subr.mxu0 0.0
    %142 = vmatpush1.msra.mxu0 0.0
    %143 = vmatprep.subr.mxu0 0.0
    %144 = vmatpush1.msra.mxu0 0.0
    %145 = vmatprep.subr.mxu0 0.0
    %146 = vmatpush1.msra.mxu0 0.0
    %147 = vmatprep.subr.mxu0 0.0
    %148 = vmatpush1.msra.mxu0 0.0
    %149 = vmatprep.subr.mxu0 0.0
    %150 = vmatpush1.msra.mxu0 0.0
    %151 = vmatprep.subr.mxu0 0.0
    %152 = vmatpush1.msra.mxu0 0.0
    %153 = vmatprep.subr.mxu0 0.0
    %154 = vmatpush1.msra.mxu0 0.0
    %155 = vmatprep.subr.mxu0 0.0
    %156 = vmatpush1.msra.mxu0 0.0
    %157 = vmatprep.mubr.f32.mxu0 0.0
    %158 = vmatmul.mubr.f32.gmra.mrb[0].mxu0 %v88
    %v159 = vpop.f32.mrb[0].mxu0
    %v160 = vadd.f32 %v86, %v159
    %v161 = vpop.f32.mrb[0].mxu0
    %162 = vmatprep.mubr.f32.mxu0 0.0
    %163 = vmatmul.mubr.f32.gmra.mrb[0].mxu0 %v91
    %v164 = vpop.f32.mrb[0].mxu0
    %v165 = vadd.f32 %v86, %v164
    %v166 = vpop.f32.mrb[0].mxu0
    %167 = vdwg.mxu0
    %v168 = vmul.f32 %v160, 0.35355338
    %v169 = vmul.f32 %v165, 0.35355338
    %v170 = vmul.f32 %v168, %v31
    %v171 = vmul.f32 %v169, %v32
    %v172 = vmul.f32 %v168, %v33
    %v173 = vmul.f32 %v169, %v34
    %v174 = vmul.f32 %v168, %v35
    %v175 = vmul.f32 %v169, %v36
    %v176 = vmul.f32 %v168, %v37
    %v177 = vmul.f32 %v169, %v38
    %180 = vrot.lane.b32.xlu0 %v160, 96
    %v181 = vpop.permute.xlu0 %180
    %182 = vrot.lane.b32.xlu0 %v165, 96
    %v183 = vpop.permute.xlu0 %182
    %192 = vrot.lane.b32.xlu0 %v31, 96
    %v193 = vpop.permute.xlu0 %192
    %194 = vrot.lane.b32.xlu0 %v32, 96
    %v195 = vpop.permute.xlu0 %194
    %196 = vrot.lane.b32.xlu0 %v33, 96
    %v197 = vpop.permute.xlu0 %196
    %198 = vrot.lane.b32.xlu0 %v34, 96
    %v199 = vpop.permute.xlu0 %198
    %200 = vrot.lane.b32.xlu0 %v35, 96
    %v201 = vpop.permute.xlu0 %200
    %202 = vrot.lane.b32.xlu0 %v36, 96
    %v203 = vpop.permute.xlu0 %202
    %204 = vrot.lane.b32.xlu0 %v37, 96
    %v205 = vpop.permute.xlu0 %204
    %206 = vrot.lane.b32.xlu0 %v38, 96
    %v207 = vpop.permute.xlu0 %206
    %v217 = vsel %vm43, %v170, 0
    %v220 = vsel %vm43, %v171, 0
    %v223 = vsel %vm43, %v172, 0
    %v226 = vsel %vm43, %v173, 0
    %v229 = vsel %vm43, %v174, 0
    %v232 = vsel %vm43, %v175, 0
    %v235 = vsel %vm43, %v176, 0
    %v238 = vsel %vm43, %v177, 0
    %v240 = vsel %vm43, %v181, 0
    %v242 = vsel %vm43, %v183, 0
    %244 = vmatprep.subr.mxu0 0.0
    %245 = vmatpush1.xpose.msra.mxu0 %v240
    %246 = vmatprep.subr.mxu0 0.0
    %247 = vmatpush1.xpose.msra.mxu0 %v242
    %248 = vmatprep.subr.mxu0 0.0
    %249 = vmatpush1.xpose.msra.mxu0 0.0
    %250 = vmatprep.subr.mxu0 0.0
    %251 = vmatpush1.xpose.msra.mxu0 0.0
    %252 = vmatprep.subr.mxu0 0.0
    %253 = vmatpush1.xpose.msra.mxu0 0.0
    %254 = vmatprep.subr.mxu0 0.0
    %255 = vmatpush1.xpose.msra.mxu0 0.0
    %256 = vmatprep.subr.mxu0 0.0
    %257 = vmatpush1.xpose.msra.mxu0 0.0
    %258 = vmatprep.subr.mxu0 0.0
    %259 = vmatpush1.xpose.msra.mxu0 0.0
    %260 = vmatprep.subr.mxu0 0.0
    %261 = vmatpush1.xpose.msra.mxu0 0.0
    %262 = vmatprep.subr.mxu0 0.0
    %263 = vmatpush1.xpose.msra.mxu0 0.0
    %264 = vmatprep.subr.mxu0 0.0
    %265 = vmatpush1.xpose.msra.mxu0 0.0
    %266 = vmatprep.subr.mxu0 0.0
    %267 = vmatpush1.xpose.msra.mxu0 0.0
    %268 = vmatprep.subr.mxu0 0.0
    %269 = vmatpush1.xpose.msra.mxu0 0.0
    %270 = vmatprep.subr.mxu0 0.0
    %271 = vmatpush1.xpose.msra.mxu0 0.0
    %272 = vmatprep.subr.mxu0 0.0
    %273 = vmatpush1.xpose.msra.mxu0 0.0
    %274 = vmatprep.subr.mxu0 0.0
    %275 = vmatpush1.xpose.msra.mxu0 0.0
    %276 = vmatprep.subr.mxu0 0.0
    %277 = vmatpush1.xpose.msra.mxu0 0.0
    %278 = vmatprep.subr.mxu0 0.0
    %279 = vmatpush1.xpose.msra.mxu0 0.0
    %280 = vmatprep.subr.mxu0 0.0
    %281 = vmatpush1.xpose.msra.mxu0 0.0
    %282 = vmatprep.subr.mxu0 0.0
    %283 = vmatpush1.xpose.msra.mxu0 0.0
    %284 = vmatprep.subr.mxu0 0.0
    %285 = vmatpush1.xpose.msra.mxu0 0.0
    %286 = vmatprep.subr.mxu0 0.0
    %287 = vmatpush1.xpose.msra.mxu0 0.0
    %288 = vmatprep.subr.mxu0 0.0
    %289 = vmatpush1.xpose.msra.mxu0 0.0
    %290 = vmatprep.subr.mxu0 0.0
    %291 = vmatpush1.xpose.msra.mxu0 0.0
    %292 = vmatprep.subr.mxu0 0.0
    %293 = vmatpush1.xpose.msra.mxu0 0.0
    %294 = vmatprep.subr.mxu0 0.0
    %295 = vmatpush1.xpose.msra.mxu0 0.0
    %296 = vmatprep.subr.mxu0 0.0
    %297 = vmatpush1.xpose.msra.mxu0 0.0
    %298 = vmatprep.subr.mxu0 0.0
    %299 = vmatpush1.xpose.msra.mxu0 0.0
    %300 = vmatprep.subr.mxu0 0.0
    %301 = vmatpush1.xpose.msra.mxu0 0.0
    %302 = vmatprep.subr.mxu0 0.0
    %303 = vmatpush1.xpose.msra.mxu0 0.0
    %304 = vmatprep.subr.mxu0 0.0
    %305 = vmatpush1.xpose.msra.mxu0 0.0
    %306 = vmatprep.subr.mxu0 0.0
    %307 = vmatpush1.xpose.msra.mxu0 0.0
    %308 = vmatprep.mubr.f32.mxu0 0.0
    %309 = vmatmul.mubr.f32.gmra.mrb[0].mxu0 %v217
    %v310 = vpop.f32.mrb[0].mxu0
    %v311 = vadd.f32 %v193, %v310
    %v312 = vpop.f32.mrb[0].mxu0
    %313 = vmatprep.mubr.f32.mxu0 0.0
    %314 = vmatmul.mubr.f32.gmra.mrb[0].mxu0 %v220
    %v315 = vpop.f32.mrb[0].mxu0
    %v316 = vadd.f32 %v195, %v315
    %v317 = vpop.f32.mrb[0].mxu0
    %318 = vmatprep.mubr.f32.mxu0 0.0
    %319 = vmatmul.mubr.f32.gmra.mrb[0].mxu0 %v223
    %v320 = vpop.f32.mrb[0].mxu0
    %v321 = vadd.f32 %v197, %v320
    %v322 = vpop.f32.mrb[0].mxu0
    %323 = vmatprep.mubr.f32.mxu0 0.0
    %324 = vmatmul.mubr.f32.gmra.mrb[0].mxu0 %v226
    %v325 = vpop.f32.mrb[0].mxu0
    %v326 = vadd.f32 %v199, %v325
    %v327 = vpop.f32.mrb[0].mxu0
    %328 = vmatprep.mubr.f32.mxu0 0.0
    %329 = vmatmul.mubr.f32.gmra.mrb[0].mxu0 %v229
    %v330 = vpop.f32.mrb[0].mxu0
    %v331 = vadd.f32 %v201, %v330
    %v332 = vpop.f32.mrb[0].mxu0
    %333 = vmatprep.mubr.f32.mxu0 0.0
    %334 = vmatmul.mubr.f32.gmra.mrb[0].mxu0 %v232
    %v335 = vpop.f32.mrb[0].mxu0
    %v336 = vadd.f32 %v203, %v335
    %v337 = vpop.f32.mrb[0].mxu0
    %338 = vmatprep.mubr.f32.mxu0 0.0
    %339 = vmatmul.mubr.f32.gmra.mrb[0].mxu0 %v235
    %v340 = vpop.f32.mrb[0].mxu0
    %v341 = vadd.f32 %v205, %v340
    %v342 = vpop.f32.mrb[0].mxu0
    %343 = vmatprep.mubr.f32.mxu0 0.0
    %344 = vmatmul.mubr.f32.gmra.mrb[0].mxu0 %v238
    %v345 = vpop.f32.mrb[0].mxu0
    %v346 = vadd.f32 %v207, %v345
    %v347 = vpop.f32.mrb[0].mxu0
    %348 = vdwg.mxu0
    %vm349 = vcmask 130048
    %v350 = vsel %vm349, %v311, -inf
    %351 = vmax.xlane.f32.xlu0 %v350
    %v352 = vpop.xlane.xlu0 %351
    %v353 = vsel %vm349, %v316, -inf
    %354 = vmax.xlane.f32.xlu0 %v353
    %v355 = vpop.xlane.xlu0 %354
    %v356 = vsel %vm349, %v321, -inf
    %357 = vmax.xlane.f32.xlu0 %v356
    %v358 = vpop.xlane.xlu0 %357
    %v359 = vsel %vm349, %v326, -inf
    %360 = vmax.xlane.f32.xlu0 %v359
    %v361 = vpop.xlane.xlu0 %360
    %v362 = vsel %vm349, %v331, -inf
    %363 = vmax.xlane.f32.xlu0 %v362
    %v364 = vpop.xlane.xlu0 %363
    %v365 = vsel %vm349, %v336, -inf
    %366 = vmax.xlane.f32.xlu0 %v365
    %v367 = vpop.xlane.xlu0 %366
    %v368 = vsel %vm349, %v341, -inf
    %369 = vmax.xlane.f32.xlu0 %v368
    %v370 = vpop.xlane.xlu0 %369
    %v371 = vsel %vm349, %v346, -inf
    %372 = vmax.xlane.f32.xlu0 %v371
    %v373 = vpop.xlane.xlu0 %372
    %v374 = vsub.f32 %v311, %v352
    %v375 = vsub.f32 %v316, %v355
    %v376 = vsub.f32 %v321, %v358
    %v377 = vsub.f32 %v326, %v361
    %v378 = vsub.f32 %v331, %v364
    %v379 = vsub.f32 %v336, %v367
    %v380 = vsub.f32 %v341, %v370
    %v381 = vsub.f32 %v346, %v373
    %v382 = vmul.f32 %v374, 1.442695
    %v383 = vpow.pop %v382
    %v384 = vmul.f32 %v375, 1.442695
    %v385 = vpow.pop %v384
    %v386 = vmul.f32 %v376, 1.442695
    %v387 = vpow.pop %v386
    %v388 = vmul.f32 %v377, 1.442695
    %v389 = vpow.pop %v388
    %v390 = vmul.f32 %v378, 1.442695
    %v391 = vpow.pop %v390
    %v392 = vmul.f32 %v379, 1.442695
    %v393 = vpow.pop %v392
    %v394 = vmul.f32 %v380, 1.442695
    %v395 = vpow.pop %v394
    %v396 = vmul.f32 %v381, 1.442695
    %v397 = vpow.pop %v396
    %v398 = vsel %vm349, %v383, 0.0
    %399 = vadd.xlane.f32.xlu0 %v398
    %v400 = vpop.xlane.xlu0 %399
    %v401 = vsel %vm349, %v385, 0.0
    %402 = vadd.xlane.f32.xlu0 %v401
    %v403 = vpop.xlane.xlu0 %402
    %v404 = vsel %vm349, %v387, 0.0
    %405 = vadd.xlane.f32.xlu0 %v404
    %v406 = vpop.xlane.xlu0 %405
    %v407 = vsel %vm349, %v389, 0.0
    %408 = vadd.xlane.f32.xlu0 %v407
    %v409 = vpop.xlane.xlu0 %408
    %v410 = vsel %vm349, %v391, 0.0
    %411 = vadd.xlane.f32.xlu0 %v410
    %v412 = vpop.xlane.xlu0 %411
    %v413 = vsel %vm349, %v393, 0.0
    %414 = vadd.xlane.f32.xlu0 %v413
    %v415 = vpop.xlane.xlu0 %414
    %v416 = vsel %vm349, %v395, 0.0
    %417 = vadd.xlane.f32.xlu0 %v416
    %v418 = vpop.xlane.xlu0 %417
    %v419 = vsel %vm349, %v397, 0.0
    %420 = vadd.xlane.f32.xlu0 %v419
    %v421 = vpop.xlane.xlu0 %420
    %v422 = vrcp.pop %v400
    %v423 = vrcp.pop %v403
    %v424 = vrcp.pop %v406
    %v425 = vrcp.pop %v409
    %v426 = vrcp.pop %v412
    %v427 = vrcp.pop %v415
    %v428 = vrcp.pop %v418
    %v429 = vrcp.pop %v421
    %v430 = vmul.f32 %v383, %v422
    %v431 = vmul.f32 %v385, %v423
    %v432 = vmul.f32 %v387, %v424
    %v433 = vmul.f32 %v389, %v425
    %v434 = vmul.f32 %v391, %v426
    %v435 = vmul.f32 %v393, %v427
    %v436 = vmul.f32 %v395, %v428
    %v437 = vmul.f32 %v397, %v429
    %438 = vrot.lane.b32.xlu0 %v160, 64
    %v439 = vpop.permute.xlu0 %438
    %440 = vrot.lane.b32.xlu0 %v165, 64
    %v441 = vpop.permute.xlu0 %440
    %v445 = vsel %vm349, %v430, 0
    %v448 = vsel %vm349, %v431, 0
    %v451 = vsel %vm349, %v432, 0
    %v454 = vsel %vm349, %v433, 0
    %v457 = vsel %vm349, %v434, 0
    %v460 = vsel %vm349, %v435, 0
    %v463 = vsel %vm349, %v436, 0
    %v466 = vsel %vm349, %v437, 0
    %468 = vmatprep.subr.mxu0 0.0
    %469 = vmatpush1.msra.mxu0 %v439
    %470 = vmatprep.subr.mxu0 0.0
    %471 = vmatpush1.msra.mxu0 %v441
    %472 = vmatprep.subr.mxu0 0.0
    %473 = vmatpush1.msra.mxu0 0.0
    %474 = vmatprep.subr.mxu0 0.0
    %475 = vmatpush1.msra.mxu0 0.0
    %476 = vmatprep.subr.mxu0 0.0
    %477 = vmatpush1.msra.mxu0 0.0
    %478 = vmatprep.subr.mxu0 0.0
    %479 = vmatpush1.msra.mxu0 0.0
    %480 = vmatprep.subr.mxu0 0.0
    %481 = vmatpush1.msra.mxu0 0.0
    %482 = vmatprep.subr.mxu0 0.0
    %483 = vmatpush1.msra.mxu0 0.0
    %484 = vmatprep.subr.mxu0 0.0
    %485 = vmatpush1.msra.mxu0 0.0
    %486 = vmatprep.subr.mxu0 0.0
    %487 = vmatpush1.msra.mxu0 0.0
    %488 = vmatprep.subr.mxu0 0.0
    %489 = vmatpush1.msra.mxu0 0.0
    %490 = vmatprep.subr.mxu0 0.0
    %491 = vmatpush1.msra.mxu0 0.0
    %492 = vmatprep.subr.mxu0 0.0
    %493 = vmatpush1.msra.mxu0 0.0
    %494 = vmatprep.subr.mxu0 0.0
    %495 = vmatpush1.msra.mxu0 0.0
    %496 = vmatprep.subr.mxu0 0.0
    %497 = vmatpush1.msra.mxu0 0.0
    %498 = vmatprep.subr.mxu0 0.0
    %499 = vmatpush1.msra.mxu0 0.0
    %500 = vmatprep.subr.mxu0 0.0
    %501 = vmatpush1.msra.mxu0 0.0
    %502 = vmatprep.subr.mxu0 0.0
    %503 = vmatpush1.msra.mxu0 0.0
    %504 = vmatprep.subr.mxu0 0.0
    %505 = vmatpush1.msra.mxu0 0.0
    %506 = vmatprep.subr.mxu0 0.0
    %507 = vmatpush1.msra.mxu0 0.0
    %508 = vmatprep.subr.mxu0 0.0
    %509 = vmatpush1.msra.mxu0 0.0
    %510 = vmatprep.subr.mxu0 0.0
    %511 = vmatpush1.msra.mxu0 0.0
    %512 = vmatprep.subr.mxu0 0.0
    %513 = vmatpush1.msra.mxu0 0.0
    %514 = vmatprep.subr.mxu0 0.0
    %515 = vmatpush1.msra.mxu0 0.0
    %516 = vmatprep.subr.mxu0 0.0
    %517 = vmatpush1.msra.mxu0 0.0
    %518 = vmatprep.subr.mxu0 0.0
    %519 = vmatpush1.msra.mxu0 0.0
    %520 = vmatprep.subr.mxu0 0.0
    %521 = vmatpush1.msra.mxu0 0.0
    %522 = vmatprep.subr.mxu0 0.0
    %523 = vmatpush1.msra.mxu0 0.0
    %524 = vmatprep.subr.mxu0 0.0
    %525 = vmatpush1.msra.mxu0 0.0
    %526 = vmatprep.subr.mxu0 0.0
    %527 = vmatpush1.msra.mxu0 0.0
    %528 = vmatprep.subr.mxu0 0.0
    %529 = vmatpush1.msra.mxu0 0.0
    %530 = vmatprep.subr.mxu0 0.0
    %531 = vmatpush1.msra.mxu0 0.0
    %532 = vmatprep.mubr.f32.mxu0 0.0
    %533 = vmatmul.mubr.f32.gmra.mrb[0].mxu0 %v445
    %v534 = vpop.f32.mrb[0].mxu0
    %v535 = vadd.f32 0.0, %v534
    %v536 = vpop.f32.mrb[0].mxu0
    %537 = vmatprep.mubr.f32.mxu0 0.0
    %538 = vmatmul.mubr.f32.gmra.mrb[0].mxu0 %v448
    %v539 = vpop.f32.mrb[0].mxu0
    %v540 = vadd.f32 0.0, %v539
    %v541 = vpop.f32.mrb[0].mxu0
    %542 = vmatprep.mubr.f32.mxu0 0.0
    %543 = vmatmul.mubr.f32.gmra.mrb[0].mxu0 %v451
    %v544 = vpop.f32.mrb[0].mxu0
    %v545 = vadd.f32 0.0, %v544
    %v546 = vpop.f32.mrb[0].mxu0
    %547 = vmatprep.mubr.f32.mxu0 0.0
    %548 = vmatmul.mubr.f32.gmra.mrb[0].mxu0 %v454
    %v549 = vpop.f32.mrb[0].mxu0
    %v550 = vadd.f32 0.0, %v549
    %v551 = vpop.f32.mrb[0].mxu0
    %552 = vmatprep.mubr.f32.mxu0 0.0
    %553 = vmatmul.mubr.f32.gmra.mrb[0].mxu0 %v457
    %v554 = vpop.f32.mrb[0].mxu0
    %v555 = vadd.f32 0.0, %v554
    %v556 = vpop.f32.mrb[0].mxu0
    %557 = vmatprep.mubr.f32.mxu0 0.0
    %558 = vmatmul.mubr.f32.gmra.mrb[0].mxu0 %v460
    %v559 = vpop.f32.mrb[0].mxu0
    %v560 = vadd.f32 0.0, %v559
    %v561 = vpop.f32.mrb[0].mxu0
    %562 = vmatprep.mubr.f32.mxu0 0.0
    %563 = vmatmul.mubr.f32.gmra.mrb[0].mxu0 %v463
    %v564 = vpop.f32.mrb[0].mxu0
    %v565 = vadd.f32 0.0, %v564
    %v566 = vpop.f32.mrb[0].mxu0
    %567 = vmatprep.mubr.f32.mxu0 0.0
    %568 = vmatmul.mubr.f32.gmra.mrb[0].mxu0 %v466
    %v569 = vpop.f32.mrb[0].mxu0
    %v570 = vadd.f32 0.0, %v569
    %v571 = vpop.f32.mrb[0].mxu0
    %572 = vdwg.mxu0
    %v573 = vmul.f32 %v535, %v31
    %v574 = vmul.f32 %v540, %v32
    %v575 = vmul.f32 %v545, %v33
    %v576 = vmul.f32 %v550, %v34
    %v577 = vmul.f32 %v555, %v35
    %v578 = vmul.f32 %v560, %v36
    %v579 = vmul.f32 %v565, %v37
    %v580 = vmul.f32 %v570, %v38
    %v581 = vadd.f32 %v573, %v575
    %v582 = vadd.f32 %v574, %v576
    %v583 = vadd.f32 %v581, %v577
    %v584 = vadd.f32 %v582, %v578
    %v585 = vadd.f32 %v583, %v579
    %v586 = vadd.f32 %v584, %v580
    %v587 = vlaneseq
    %v588 = vshrl.u32 %v587, 7
    %v589 = vsub.s32 0, %v588
    %v590 = vrot.slane %v26, %v589
    %595 = vrot.lane.b32.xlu0 %v39, 32
    %v596 = vpop.permute.xlu0 %595
    %597 = vrot.lane.b32.xlu0 %v40, 32
    %v598 = vpop.permute.xlu0 %597
    %599 = vrot.lane.b32.xlu0 %v41, 32
    %v600 = vpop.permute.xlu0 %599
    %601 = vrot.lane.b32.xlu0 %v42, 32
    %v602 = vpop.permute.xlu0 %601
    %v608 = vsel %vm43, %v585, 0
    %v611 = vsel %vm43, %v586, 0
    %613 = vmatprep.subr.mxu0 0.0
    %614 = vmatpush1.msra.mxu0 %v596
    %615 = vmatprep.subr.mxu0 0.0
    %616 = vmatpush1.msra.mxu0 %v598
    %617 = vmatprep.subr.mxu0 0.0
    %618 = vmatpush1.msra.mxu0 %v600
    %619 = vmatprep.subr.mxu0 0.0
    %620 = vmatpush1.msra.mxu0 %v602
    %621 = vmatprep.subr.mxu0 0.0
    %622 = vmatpush1.msra.mxu0 0.0
    %623 = vmatprep.subr.mxu0 0.0
    %624 = vmatpush1.msra.mxu0 0.0
    %625 = vmatprep.subr.mxu0 0.0
    %626 = vmatpush1.msra.mxu0 0.0
    %627 = vmatprep.subr.mxu0 0.0
    %628 = vmatpush1.msra.mxu0 0.0
    %629 = vmatprep.subr.mxu0 0.0
    %630 = vmatpush1.msra.mxu0 0.0
    %631 = vmatprep.subr.mxu0 0.0
    %632 = vmatpush1.msra.mxu0 0.0
    %633 = vmatprep.subr.mxu0 0.0
    %634 = vmatpush1.msra.mxu0 0.0
    %635 = vmatprep.subr.mxu0 0.0
    %636 = vmatpush1.msra.mxu0 0.0
    %637 = vmatprep.subr.mxu0 0.0
    %638 = vmatpush1.msra.mxu0 0.0
    %639 = vmatprep.subr.mxu0 0.0
    %640 = vmatpush1.msra.mxu0 0.0
    %641 = vmatprep.subr.mxu0 0.0
    %642 = vmatpush1.msra.mxu0 0.0
    %643 = vmatprep.subr.mxu0 0.0
    %644 = vmatpush1.msra.mxu0 0.0
    %645 = vmatprep.subr.mxu0 0.0
    %646 = vmatpush1.msra.mxu0 0.0
    %647 = vmatprep.subr.mxu0 0.0
    %648 = vmatpush1.msra.mxu0 0.0
    %649 = vmatprep.subr.mxu0 0.0
    %650 = vmatpush1.msra.mxu0 0.0
    %651 = vmatprep.subr.mxu0 0.0
    %652 = vmatpush1.msra.mxu0 0.0
    %653 = vmatprep.subr.mxu0 0.0
    %654 = vmatpush1.msra.mxu0 0.0
    %655 = vmatprep.subr.mxu0 0.0
    %656 = vmatpush1.msra.mxu0 0.0
    %657 = vmatprep.subr.mxu0 0.0
    %658 = vmatpush1.msra.mxu0 0.0
    %659 = vmatprep.subr.mxu0 0.0
    %660 = vmatpush1.msra.mxu0 0.0
    %661 = vmatprep.subr.mxu0 0.0
    %662 = vmatpush1.msra.mxu0 0.0
    %663 = vmatprep.subr.mxu0 0.0
    %664 = vmatpush1.msra.mxu0 0.0
    %665 = vmatprep.subr.mxu0 0.0
    %666 = vmatpush1.msra.mxu0 0.0
    %667 = vmatprep.subr.mxu0 0.0
    %668 = vmatpush1.msra.mxu0 0.0
    %669 = vmatprep.subr.mxu0 0.0
    %670 = vmatpush1.msra.mxu0 0.0
    %671 = vmatprep.subr.mxu0 0.0
    %672 = vmatpush1.msra.mxu0 0.0
    %673 = vmatprep.subr.mxu0 0.0
    %674 = vmatpush1.msra.mxu0 0.0
    %675 = vmatprep.subr.mxu0 0.0
    %676 = vmatpush1.msra.mxu0 0.0
    %677 = vmatprep.mubr.f32.mxu0 0.0
    %678 = vmatmul.mubr.f32.gmra.mrb[0].mxu0 %v608
    %v679 = vpop.f32.mrb[0].mxu0
    %v680 = vadd.f32 %v590, %v679
    %v681 = vpop.f32.mrb[0].mxu0
    %682 = vmatprep.mubr.f32.mxu0 0.0
    %683 = vmatmul.mubr.f32.gmra.mrb[0].mxu0 %v611
    %v684 = vpop.f32.mrb[0].mxu0
    %v685 = vadd.f32 %v590, %v684
    %v686 = vpop.f32.mrb[0].mxu0
    %687 = vdwg.mxu0
    %v688 = vadd.f32 %v21, %v680
    %v689 = vadd.f32 %v22, %v685
    %v690 = vsel %vm43, %v688, 0.0
    %691 = vadd.xlane.f32.xlu0 %v690
    %v692 = vpop.xlane.xlu0 %691
    %v693 = vsel %vm43, %v689, 0.0
    %694 = vadd.xlane.f32.xlu0 %v693
    %v695 = vpop.xlane.xlu0 %694
    %v696 = vmul.f32 %v692, %v50
    %v697 = vmul.f32 %v695, %v50
    %v698 = vsub.f32 %v688, %v696
    %v699 = vsub.f32 %v689, %v697
    %v700 = vmul.f32 %v698, %v698
    %v701 = vmul.f32 %v699, %v699
    %v702 = vsel %vm43, %v700, 0.0
    %703 = vadd.xlane.f32.xlu0 %v702
    %v704 = vpop.xlane.xlu0 %703
    %v705 = vsel %vm43, %v701, 0.0
    %706 = vadd.xlane.f32.xlu0 %v705
    %v707 = vpop.xlane.xlu0 %706
    %v708 = vmul.f32 %v704, %v50
    %v709 = vmul.f32 %v707, %v50
    %v710 = vadd.f32 %v708, 1e-05
    %v711 = vadd.f32 %v709, 1e-05
    %v712 = vrsqrt.pop %v710
    %v713 = vrsqrt.pop %v711
    %v714 = vmul.f32 %v698, %v712
    %v715 = vmul.f32 %v699, %v713
    %v716 = vlaneseq
    %v717 = vshrl.u32 %v716, 7
    %v718 = vsub.s32 0, %v717
    %v719 = vrot.slane %v27, %v718
    %v720 = vmul.f32 %v714, %v719
    %v721 = vmul.f32 %v715, %v719
    %v722 = vlaneseq
    %v723 = vshrl.u32 %v722, 7
    %v724 = vsub.s32 0, %v723
    %v725 = vrot.slane %v28, %v724
    %v726 = vadd.f32 %v720, %v725
    %v727 = vadd.f32 %v721, %v725
    %v728 = vld [vmem:[%s3] sm:$0xff]
    %v729 = vld [vmem:[%s3 + $0x8] sm:$0xff]
    %v730 = vld [vmem:[%s3 + $0x10] sm:$0xff]
    %v731 = vld [vmem:[%s3 + $0x18] sm:$0xff]
    %v732 = vlaneseq
    %v733 = vshrl.u32 %v732, 7
    %v734 = vsub.s32 0, %v733
    %v735 = vrot.slane %v29, %v734
    %v737 = vsel %vm43, %v726, 0
    %v740 = vsel %vm43, %v727, 0
    %742 = vmatprep.subr.mxu0 0.0
    %743 = vmatpush1.msra.mxu0 %v728
    %744 = vmatprep.subr.mxu0 0.0
    %745 = vmatpush1.msra.mxu0 %v729
    %746 = vmatprep.subr.mxu0 0.0
    %747 = vmatpush1.msra.mxu0 %v730
    %748 = vmatprep.subr.mxu0 0.0
    %749 = vmatpush1.msra.mxu0 %v731
    %750 = vmatprep.subr.mxu0 0.0
    %751 = vmatpush1.msra.mxu0 0.0
    %752 = vmatprep.subr.mxu0 0.0
    %753 = vmatpush1.msra.mxu0 0.0
    %754 = vmatprep.subr.mxu0 0.0
    %755 = vmatpush1.msra.mxu0 0.0
    %756 = vmatprep.subr.mxu0 0.0
    %757 = vmatpush1.msra.mxu0 0.0
    %758 = vmatprep.subr.mxu0 0.0
    %759 = vmatpush1.msra.mxu0 0.0
    %760 = vmatprep.subr.mxu0 0.0
    %761 = vmatpush1.msra.mxu0 0.0
    %762 = vmatprep.subr.mxu0 0.0
    %763 = vmatpush1.msra.mxu0 0.0
    %764 = vmatprep.subr.mxu0 0.0
    %765 = vmatpush1.msra.mxu0 0.0
    %766 = vmatprep.subr.mxu0 0.0
    %767 = vmatpush1.msra.mxu0 0.0
    %768 = vmatprep.subr.mxu0 0.0
    %769 = vmatpush1.msra.mxu0 0.0
    %770 = vmatprep.subr.mxu0 0.0
    %771 = vmatpush1.msra.mxu0 0.0
    %772 = vmatprep.subr.mxu0 0.0
    %773 = vmatpush1.msra.mxu0 0.0
    %774 = vmatprep.subr.mxu0 0.0
    %775 = vmatpush1.msra.mxu0 0.0
    %776 = vmatprep.subr.mxu0 0.0
    %777 = vmatpush1.msra.mxu0 0.0
    %778 = vmatprep.subr.mxu0 0.0
    %779 = vmatpush1.msra.mxu0 0.0
    %780 = vmatprep.subr.mxu0 0.0
    %781 = vmatpush1.msra.mxu0 0.0
    %782 = vmatprep.subr.mxu0 0.0
    %783 = vmatpush1.msra.mxu0 0.0
    %784 = vmatprep.subr.mxu0 0.0
    %785 = vmatpush1.msra.mxu0 0.0
    %786 = vmatprep.subr.mxu0 0.0
    %787 = vmatpush1.msra.mxu0 0.0
    %788 = vmatprep.subr.mxu0 0.0
    %789 = vmatpush1.msra.mxu0 0.0
    %790 = vmatprep.subr.mxu0 0.0
    %791 = vmatpush1.msra.mxu0 0.0
    %792 = vmatprep.subr.mxu0 0.0
    %793 = vmatpush1.msra.mxu0 0.0
    %794 = vmatprep.subr.mxu0 0.0
    %795 = vmatpush1.msra.mxu0 0.0
    %796 = vmatprep.subr.mxu0 0.0
    %797 = vmatpush1.msra.mxu0 0.0
    %798 = vmatprep.subr.mxu0 0.0
    %799 = vmatpush1.msra.mxu0 0.0
    %800 = vmatprep.subr.mxu0 0.0
    %801 = vmatpush1.msra.mxu0 0.0
    %802 = vmatprep.subr.mxu0 0.0
    %803 = vmatpush1.msra.mxu0 0.0
    %804 = vmatprep.subr.mxu0 0.0
    %805 = vmatpush1.msra.mxu0 0.0
    %806 = vmatprep.mubr.f32.mxu0 0.0
    %807 = vmatmul.mubr.f32.gmra.mrb[0].mxu0 %v737
    %v808 = vpop.f32.mrb[0].mxu0
    %v809 = vadd.f32 %v735, %v808
    %v810 = vpop.f32.mrb[0].mxu0
    %811 = vmatprep.mubr.f32.mxu0 0.0
    %812 = vmatmul.mubr.f32.gmra.mrb[0].mxu0 %v740
    %v813 = vpop.f32.mrb[0].mxu0
    %v814 = vadd.f32 %v735, %v813
    %v815 = vpop.f32.mrb[0].mxu0
    %816 = vdwg.mxu0
    %v817 = vmul.f32 %v809, 0.5
    %v818 = vmul.f32 %v814, 0.5
    %v819 = vmul.f32 %v809, 0.044715
    %v820 = vmul.f32 %v814, 0.044715
    %v821 = vmul.f32 %v819, %v809
    %v822 = vmul.f32 %v820, %v814
    %v823 = vmul.f32 %v821, %v809
    %v824 = vmul.f32 %v822, %v814
    %v825 = vadd.f32 %v809, %v823
    %v826 = vadd.f32 %v814, %v824
    %v827 = vmul.f32 %v825, 0.7978846
    %v828 = vmul.f32 %v826, 0.7978846
    %v829 = vtanh.pop %v827
    %v830 = vtanh.pop %v828
    %v831 = vadd.f32 %v829, 1.0
    %v832 = vadd.f32 %v830, 1.0
    %v833 = vmul.f32 %v817, %v831
    %v834 = vmul.f32 %v818, %v832
    %v835 = vld [vmem:[%s4] sm:$0xff]
    %v836 = vld [vmem:[%s4 + $0x8] sm:$0xff]
    %v837 = vld [vmem:[%s4 + $0x10] sm:$0xff]
    %v838 = vld [vmem:[%s4 + $0x18] sm:$0xff]
    %v839 = vld [vmem:[%s4 + $0x20] sm:$0xff]
    %v840 = vld [vmem:[%s4 + $0x28] sm:$0xff]
    %v841 = vld [vmem:[%s4 + $0x30] sm:$0xff]
    %v842 = vld [vmem:[%s4 + $0x38] sm:$0xff]
    %v843 = vld [vmem:[%s4 + $0x40] sm:$0xff]
    %v844 = vld [vmem:[%s4 + $0x48] sm:$0xff]
    %v845 = vld [vmem:[%s4 + $0x50] sm:$0xff]
    %v846 = vld [vmem:[%s4 + $0x58] sm:$0xff]
    %v847 = vld [vmem:[%s4 + $0x60] sm:$0xff]
    %v848 = vld [vmem:[%s4 + $0x68] sm:$0xff]
    %v849 = vld [vmem:[%s4 + $0x70] sm:$0xff]
    %v850 = vld [vmem:[%s4 + $0x78] sm:$0xff]
    %v851 = vlaneseq
    %v852 = vshrl.u32 %v851, 7
    %v853 = vsub.s32 0, %v852
    %v854 = vrot.slane %v30, %v853
    %855 = vmatprep.subr.mxu0 0.0
    %856 = vmatpush1.msra.mxu0 %v835
    %857 = vmatprep.subr.mxu0 0.0
    %858 = vmatpush1.msra.mxu0 %v836
    %859 = vmatprep.subr.mxu0 0.0
    %860 = vmatpush1.msra.mxu0 %v837
    %861 = vmatprep.subr.mxu0 0.0
    %862 = vmatpush1.msra.mxu0 %v838
    %863 = vmatprep.subr.mxu0 0.0
    %864 = vmatpush1.msra.mxu0 %v839
    %865 = vmatprep.subr.mxu0 0.0
    %866 = vmatpush1.msra.mxu0 %v840
    %867 = vmatprep.subr.mxu0 0.0
    %868 = vmatpush1.msra.mxu0 %v841
    %869 = vmatprep.subr.mxu0 0.0
    %870 = vmatpush1.msra.mxu0 %v842
    %871 = vmatprep.subr.mxu0 0.0
    %872 = vmatpush1.msra.mxu0 %v843
    %873 = vmatprep.subr.mxu0 0.0
    %874 = vmatpush1.msra.mxu0 %v844
    %875 = vmatprep.subr.mxu0 0.0
    %876 = vmatpush1.msra.mxu0 %v845
    %877 = vmatprep.subr.mxu0 0.0
    %878 = vmatpush1.msra.mxu0 %v846
    %879 = vmatprep.subr.mxu0 0.0
    %880 = vmatpush1.msra.mxu0 %v847
    %881 = vmatprep.subr.mxu0 0.0
    %882 = vmatpush1.msra.mxu0 %v848
    %883 = vmatprep.subr.mxu0 0.0
    %884 = vmatpush1.msra.mxu0 %v849
    %885 = vmatprep.subr.mxu0 0.0
    %886 = vmatpush1.msra.mxu0 %v850
    %887 = vmatprep.subr.mxu0 0.0
    %888 = vmatpush1.msra.mxu0 0.0
    %889 = vmatprep.subr.mxu0 0.0
    %890 = vmatpush1.msra.mxu0 0.0
    %891 = vmatprep.subr.mxu0 0.0
    %892 = vmatpush1.msra.mxu0 0.0
    %893 = vmatprep.subr.mxu0 0.0
    %894 = vmatpush1.msra.mxu0 0.0
    %895 = vmatprep.subr.mxu0 0.0
    %896 = vmatpush1.msra.mxu0 0.0
    %897 = vmatprep.subr.mxu0 0.0
    %898 = vmatpush1.msra.mxu0 0.0
    %899 = vmatprep.subr.mxu0 0.0
    %900 = vmatpush1.msra.mxu0 0.0
    %901 = vmatprep.subr.mxu0 0.0
    %902 = vmatpush1.msra.mxu0 0.0
    %903 = vmatprep.subr.mxu0 0.0
    %904 = vmatpush1.msra.mxu0 0.0
    %905 = vmatprep.subr.mxu0 0.0
    %906 = vmatpush1.msra.mxu0 0.0
    %907 = vmatprep.subr.mxu0 0.0
    %908 = vmatpush1.msra.mxu0 0.0
    %909 = vmatprep.subr.mxu0 0.0
    %910 = vmatpush1.msra.mxu0 0.0
    %911 = vmatprep.subr.mxu0 0.0
    %912 = vmatpush1.msra.mxu0 0.0
    %913 = vmatprep.subr.mxu0 0.0
    %914 = vmatpush1.msra.mxu0 0.0
    %915 = vmatprep.subr.mxu0 0.0
    %916 = vmatpush1.msra.mxu0 0.0
    %917 = vmatprep.subr.mxu0 0.0
    %918 = vmatpush1.msra.mxu0 0.0
    %919 = vmatprep.mubr.f32.mxu0 0.0
    %920 = vmatmul.mubr.f32.gmra.mrb[0].mxu0 %v833
    %v921 = vpop.f32.mrb[0].mxu0
    %v922 = vadd.f32 %v854, %v921
    %v923 = vpop.f32.mrb[0].mxu0
    %924 = vmatprep.mubr.f32.mxu0 0.0
    %925 = vmatmul.mubr.f32.gmra.mrb[0].mxu0 %v834
    %v926 = vpop.f32.mrb[0].mxu0
    %v927 = vadd.f32 %v854, %v926
    %v928 = vpop.f32.mrb[0].mxu0
    %929 = vdwg.mxu0
    %v930 = vadd.f32 %v688, %v922
    %v931 = vadd.f32 %v689, %v927
    %932 = vst.msk [vmem:[#allocation2] sm:$0xff] %vm43, %v930
    %933 = vst.msk [vmem:[#allocation2 + $0x8] sm:$0xff] %vm43, %v931
    // Predicated region
    $region22: #{tpu_custom_call.1} parent=1 // pred_check
      _
    $region23: #{tpu_custom_call.1} parent=1 // pred_check_branch
      %935 = sbr.rel (0) target = $region25
    $region24: #{tpu_custom_call.1} parent=1 // pred_region
      %s937 = ssub.s32 256, 256
      %938 = vsyncadd [#allocation3], %s937
      %s939 = sshll.u32 [#allocation2], 4
      %s940 = int_to_ptr.vmem [resolvable:$true] %s939
      %945 = dma.vmem_to_hbm [thread:$0]  %s940, 256, %s5, [#allocation3], 128, 128, 8
    $region25: #{tpu_custom_call.1} parent=1 // pred_fallthru
      _
    // Predicated region
    $region26: #{tpu_custom_call.1} parent=1 // pred_check
      _
    $region27: #{tpu_custom_call.1} parent=1 // pred_check_branch
      %947 = sbr.rel (0) target = $region29
    $region28: #{tpu_custom_call.1} parent=1 // pred_region
      %948 = dma.done [#allocation3], 256
    $region29: #{tpu_custom_call.1} parent=1 // pred_fallthru
      _
    %949 = vsyncpa [#allocation3], 1

</llo_original>
